<compile_context>
chip_gen: v7x
topology: tpu7x:2x2x1
jax: 0.10.0
libtpu: 0.0.40
codegen_flags: <defaults>
</compile_context>

<pallas_src>
import jax
import jax.numpy as jnp
from jax.experimental import pallas as pl
from jax.experimental.pallas import tpu as pltpu


B = 5                        # logical batch (no wrapper-side padding)
IN_DIM = 100
HID = 200
N_HEADS = 3
HEAD_PAD = 256               # per-head lane width (multiple of 128 -> unmasked stores)
OUT_PAD = N_HEADS * HEAD_PAD  # 768 fused output lanes


def fused_heads_kernel(x_ref, w_ref, b_ref, o0_ref, o1_ref, o2_ref):
    # One MXU push/drain: (5, 100) bf16 @ (100, 768) bf16 -> f32 accumulate.
    x_bf16 = x_ref[...].astype(jnp.bfloat16)
    acc = jnp.dot(x_bf16, w_ref[...], preferred_element_type=jnp.float32)
    acc = acc + b_ref[...]                      # (1, 768) bias broadcast
    # Heads sit on 256-lane boundaries -> vreg-aligned slices, unmasked vst.
    o0_ref[...] = acc[:, 0 * HEAD_PAD:1 * HEAD_PAD]
    o1_ref[...] = acc[:, 1 * HEAD_PAD:2 * HEAD_PAD]
    o2_ref[...] = acc[:, 2 * HEAD_PAD:3 * HEAD_PAD]


def prepare_fused_params(params):
    """Constant-fold the whole forward chain (done once; weights are static).

    torch semantics:
      y     = x @ W0.T + b0                      (B, 200)
      f     = concat([y]*5, axis=1)              (B, 1000)
      out_i = f @ Wi.T + bi                      (B, 200)
    Since f is five tiled copies of y:
      f @ Wi.T = y @ Wsum_i.T,  Wsum_i = sum_k Wi[:, k*200:(k+1)*200]
    Folding the first layer in:
      out_i = x @ (W0.T @ Wsum_i.T) + (b0 @ Wsum_i.T + bi)
    Each head's folded (100, 200) weight column block is padded to 256 lanes and
    concatenated -> (100, 768); the weight is stored bf16, biases stay f32.
    """
    (w0, b0), *heads = params
    w_cols, b_cols = [], []
    for (wi, bi) in heads:
        wsum = wi.reshape(HID, 5, HID).sum(axis=1)          # (200, 200) [out, in]
        w_head = w0.T @ wsum.T                              # (100, 200) f32
        b_head = b0 @ wsum.T + bi                           # (200,)     f32
        w_cols.append(jnp.pad(w_head, ((0, 0), (0, HEAD_PAD - HID))))   # (100, 256)
        b_cols.append(jnp.pad(b_head, ((0, HEAD_PAD - HID),)))          # (256,)
    w_fused = jnp.concatenate(w_cols, axis=1).astype(jnp.bfloat16)      # (100, 768) bf16
    b_fused = jnp.concatenate(b_cols, axis=0)[None, :]                  # (1, 768)   f32
    return w_fused, b_fused


def model_forward(x, w_fused, b_fused):
    """x: (B, 100) f32; w_fused: (100, 768) bf16; b_fused: (1, 768) f32."""
    b = x.shape[0]
    vmem = pl.BlockSpec(memory_space=pltpu.MemorySpace.VMEM)
    out_sds = jax.ShapeDtypeStruct((b, HEAD_PAD), jnp.float32)

    cost = pl.CostEstimate(
        flops=2 * b * IN_DIM * OUT_PAD,
        transcendentals=0,
        bytes_accessed=(x.size * 4              # x (f32)
                        + w_fused.size * 2      # fused weight (bf16)
                        + b_fused.size * 4      # bias (f32)
                        + N_HEADS * b * HEAD_PAD * 4),  # outputs (f32)
    )

    o0, o1, o2 = pl.pallas_call(
        fused_heads_kernel,
        out_shape=(out_sds, out_sds, out_sds),
        in_specs=[vmem, vmem, vmem],
        out_specs=(vmem, vmem, vmem),
        cost_estimate=cost,
    )(x, w_fused, b_fused)

    # Trailing-trim only (no mid-lane-offset slicing).
    return tuple(o[:, :HID] for o in (o0, o1, o2))


def init_params(key):
    """Deterministic init mimicking torch.nn.Linear (uniform +-1/sqrt(fan_in))."""
    in0, hid, in1 = IN_DIM, HID, 5 * HID
    shapes = [((hid, in0), in0),   # layers
              ((hid, in1), in1),   # layers1
              ((hid, in1), in1),   # layers2
              ((hid, in1), in1)]   # layers3
    params = []
    for (wshape, fan_in) in shapes:
        key, kw, kb = jax.random.split(key, 3)
        bound = 1.0 / jnp.sqrt(jnp.float32(fan_in))
        w = jax.random.uniform(kw, wshape, jnp.float32, -bound, bound)
        b = jax.random.uniform(kb, (wshape[0],), jnp.float32, -bound, bound)
        params.append((w, b))
    return params


def reference_forward(x, params):
    """Original (unfused) f32 computation order, matching the torch module."""
    (w0, b0), (w1, b1), (w2, b2), (w3, b3) = params
    y = x @ w0.T + b0
    f = jnp.tile(y, (1, 5))
    return (f @ w1.T + b1, f @ w2.T + b2, f @ w3.T + b3)


if __name__ == "__main__":
    key = jax.random.PRNGKey(0)
    key, kx = jax.random.split(key)
    x = jax.random.normal(kx, (B, IN_DIM), jnp.float32)

    params = init_params(key)

    # Weight folding + bf16 cast happen once, outside the hot path.
    w_fused, b_fused = prepare_fused_params(params)
    w_fused, b_fused = jax.block_until_ready((w_fused, b_fused))

    outs = model_forward(x, w_fused, b_fused)
    outs = jax.block_until_ready(outs)

    refs = reference_forward(x, params)
    for o, r in zip(outs, refs):
        assert o.shape == (B, HID), o.shape
        # Tolerance covers (a) fp32 summation reorder from constant folding and
        # (b) bf16 storage of the fused weight / bf16 MXU inputs (K=100 contraction,
        # f32 accumulation): observed error is O(1e-3).
        assert jnp.allclose(o, r, atol=5e-3, rtol=5e-3), "mismatch vs JAX reference"

    print("KERNEL_OK")
</pallas_src>

<mosaic_0001>
module attributes {stable_mosaic.version = 11 : i64} {
  func.func @fused_heads_kernel(%arg0: memref<5x100xf32, #tpu.memory_space<vmem>>, %arg1: memref<100x768xbf16, #tpu.memory_space<vmem>>, %arg2: memref<1x768xf32, #tpu.memory_space<vmem>>, %arg3: memref<5x256xf32, #tpu.memory_space<vmem>>, %arg4: memref<5x256xf32, #tpu.memory_space<vmem>>, %arg5: memref<5x256xf32, #tpu.memory_space<vmem>>) attributes {dimension_semantics = [], scalar_prefetch = 0 : i64, scratch_operands = 0 : i64, tpu.core_type = #tpu.core_type<tc>} {
    %c0 = arith.constant 0 : index
    %c0_0 = arith.constant 0 : index
    %0 = vector.load %arg0[%c0, %c0_0] : memref<5x100xf32, #tpu.memory_space<vmem>>, vector<5x100xf32>
    %1 = arith.truncf %0 : vector<5x100xf32> to vector<5x100xbf16>
    %c0_1 = arith.constant 0 : index
    %c0_2 = arith.constant 0 : index
    %2 = vector.load %arg1[%c0_1, %c0_2] : memref<100x768xbf16, #tpu.memory_space<vmem>>, vector<100x768xbf16>
    %cst = arith.constant dense<0.000000e+00> : vector<5x768xf32>
    %3 = tpu.matmul %1, %2, %cst {dimension_numbers = #tpu.dot_dimension_numbers<[1], [0], [0], [1], [0, 0, 1, 1], [], []>} : vector<5x100xbf16>, vector<100x768xbf16>, vector<5x768xf32> -> vector<5x768xf32>
    %c0_3 = arith.constant 0 : index
    %c0_4 = arith.constant 0 : index
    %4 = vector.load %arg2[%c0_3, %c0_4] : memref<1x768xf32, #tpu.memory_space<vmem>>, vector<1x768xf32>
    %5 = vector.broadcast %4 : vector<1x768xf32> to vector<5x768xf32>
    %6 = arith.addf %3, %5 : vector<5x768xf32>
    %7 = vector.extract_strided_slice %6 {offsets = [0, 0], sizes = [5, 256], strides = [1, 1]} : vector<5x768xf32> to vector<5x256xf32>
    %c0_5 = arith.constant 0 : index
    %c0_6 = arith.constant 0 : index
    %8 = vector.load %arg3[%c0_5, %c0_6] : memref<5x256xf32, #tpu.memory_space<vmem>>, vector<5x256xf32>
    tpu.vector_store %arg3[%c0_5, %c0_6], %7 {strides = array<i32>} : memref<5x256xf32, #tpu.memory_space<vmem>>, vector<5x256xf32>,
    %9 = vector.extract_strided_slice %6 {offsets = [0, 256], sizes = [5, 256], strides = [1, 1]} : vector<5x768xf32> to vector<5x256xf32>
    %c0_7 = arith.constant 0 : index
    %c0_8 = arith.constant 0 : index
    %10 = vector.load %arg4[%c0_7, %c0_8] : memref<5x256xf32, #tpu.memory_space<vmem>>, vector<5x256xf32>
    tpu.vector_store %arg4[%c0_7, %c0_8], %9 {strides = array<i32>} : memref<5x256xf32, #tpu.memory_space<vmem>>, vector<5x256xf32>,
    %11 = vector.extract_strided_slice %6 {offsets = [0, 512], sizes = [5, 256], strides = [1, 1]} : vector<5x768xf32> to vector<5x256xf32>
    %c0_9 = arith.constant 0 : index
    %c0_10 = arith.constant 0 : index
    %12 = vector.load %arg5[%c0_9, %c0_10] : memref<5x256xf32, #tpu.memory_space<vmem>>, vector<5x256xf32>
    tpu.vector_store %arg5[%c0_9, %c0_10], %11 {strides = array<i32>} : memref<5x256xf32, #tpu.memory_space<vmem>>, vector<5x256xf32>,
    return
  }
}

</mosaic_0001>

<llo_original>
// kernel: tpu_custom_call.1
$region0: #{tpu_custom_call.1}
  #allocation0 [shape = 'u32[]', space=smem, size = 0x4, offset = 0x4, fixed_abs, tag = 'smem constant byte address 0x4 - core index']
  #allocation1 [shape = 'u32[144,128]{1,0:T(1,128)}', space=vmem, size = 0x12000, scoped, tag = 'internal scratch']
  %s0 = inlined_call_operand.hbm [shape: f32[5,100], index: 0, kind: input, shape index: {}]
  %s1 = inlined_call_operand.hbm [shape: bf16[100,768], index: 1, kind: input, shape index: {}]
  %s2 = inlined_call_operand.vmem [shape: f32[1,768], index: 2, kind: input, shape index: {}]
  %s3 = inlined_call_operand.hbm [shape: f32[5,256], index: 3, kind: output, shape index: {0}]
  %s4 = inlined_call_operand.hbm [shape: f32[5,256], index: 4, kind: output, shape index: {1}]
  %s5 = inlined_call_operand.hbm [shape: f32[5,256], index: 5, kind: output, shape index: {2}]
  %6 = xla_tuple %s3, %s4, %s5
  %s7 = sld [smem:[#allocation0]]
  $region46: #{tpu_custom_call.1} parent=0
    _
  %s9 = ssub.s32 1, %s7
  %s10 = scalar_select 0, %s9, %s7
  $region1: #{tpu_custom_call.1} parent=0
    #allocation2 [shape = 'u8[4096]{0}', space=vmem, size = 0x1000, scoped, tag = 'input window, operand 0, single buffered']
    #allocation3 [shape = 's32[1]{0}', space=sflag, size = 0x4, scoped, tag = 'scoped memory for tpu_custom_call.1']
    #allocation4 [shape = 's32[1]{0}', space=sflag, size = 0x4, scoped, tag = 'scoped memory for tpu_custom_call.1']
    #allocation5 [shape = 'u8[159744]{0}', space=vmem, size = 0x27000, scoped, tag = 'input window, operand 1, single buffered']
    #allocation6 [shape = 's32[1]{0}', space=sflag, size = 0x4, scoped, tag = 'scoped memory for tpu_custom_call.1']
    #allocation7 [shape = 'u8[8192]{0}', space=vmem, size = 0x2000, scoped, tag = 'output window, operand 0, single buffered']
    #allocation8 [shape = 'u8[8192]{0}', space=vmem, size = 0x2000, scoped, tag = 'output window, operand 1, single buffered']
    #allocation9 [shape = 's32[1]{0}', space=sflag, size = 0x4, scoped, tag = 'scoped memory for tpu_custom_call.1']
    #allocation10 [shape = 'u8[8192]{0}', space=vmem, size = 0x2000, scoped, tag = 'output window, operand 2, single buffered']
    %11 = vsyncpa [#allocation3], 0
    %12 = vsyncpa [#allocation6], 0
    %13 = vsyncpa [#allocation4], 0
    %14 = vsyncpa [#allocation9], 0
    // Predicated region
    $region2: #{tpu_custom_call.1} parent=1 // pred_check
      _
    $region3: #{tpu_custom_call.1} parent=1 // pred_check_branch
      %16 = sbr.rel (0) target = $region5
    $region4: #{tpu_custom_call.1} parent=1 // pred_region
      %s18 = ssub.s32 128, 128
      %19 = vsyncadd [#allocation3], %s18
      %s21 = sshll.u32 [#allocation2], 4
      %s22 = int_to_ptr.vmem [resolvable:$true] %s21
      %24 = dma.hbm_to_vmem [thread:$0]  %s0, 128, %s22, [#allocation3]
    $region5: #{tpu_custom_call.1} parent=1 // pred_fallthru
      _
    // Predicated region
    $region6: #{tpu_custom_call.1} parent=1 // pred_check
      _
    $region7: #{tpu_custom_call.1} parent=1 // pred_check_branch
      %26 = sbr.rel (0) target = $region9
    $region8: #{tpu_custom_call.1} parent=1 // pred_region
      %s28 = ssub.s32 4992, 4992
      %29 = vsyncadd [#allocation6], %s28
      %s30 = sshll.u32 [#allocation5], 4
      %s31 = int_to_ptr.vmem [resolvable:$true] %s30
      %36 = dma.hbm_to_vmem [thread:$0]  %s1, 4992, %s31, [#allocation6], 384, 384, 24
    $region9: #{tpu_custom_call.1} parent=1 // pred_fallthru
      _
    // Predicated region
    $region10: #{tpu_custom_call.1} parent=1 // pred_check
      _
    $region11: #{tpu_custom_call.1} parent=1 // pred_check_branch
      %38 = sbr.rel (0) target = $region13
    $region12: #{tpu_custom_call.1} parent=1 // pred_region
      _
    $region13: #{tpu_custom_call.1} parent=1 // pred_fallthru
      _
    // Predicated region
    $region14: #{tpu_custom_call.1} parent=1 // pred_check
      _
    $region15: #{tpu_custom_call.1} parent=1 // pred_check_branch
      %40 = sbr.rel (0) target = $region17
    $region16: #{tpu_custom_call.1} parent=1 // pred_region
      %41 = dma.done [#allocation3], 128
    $region17: #{tpu_custom_call.1} parent=1 // pred_fallthru
      _
    // Predicated region
    $region18: #{tpu_custom_call.1} parent=1 // pred_check
      _
    $region19: #{tpu_custom_call.1} parent=1 // pred_check_branch
      %43 = sbr.rel (0) target = $region21
    $region20: #{tpu_custom_call.1} parent=1 // pred_region
      %44 = dma.done [#allocation6], 4992
    $region21: #{tpu_custom_call.1} parent=1 // pred_fallthru
      _
    %v46 = vld [vmem:[#allocation2] sm:$0x1f]
    %v47 = vpack.c.bf16 %v46, %v46
    %v48 = vld [vmem:[#allocation5] sm:$0xff]
    %v49 = vld [vmem:[#allocation5 + $0x8] sm:$0xff]
    %v50 = vld [vmem:[#allocation5 + $0x10] sm:$0xff]
    %v51 = vld [vmem:[#allocation5 + $0x18] sm:$0xff]
    %v52 = vld [vmem:[#allocation5 + $0x20] sm:$0xff]
    %v53 = vld [vmem:[#allocation5 + $0x28] sm:$0xff]
    %v54 = vld [vmem:[#allocation5 + $0x30] sm:$0xff]
    %v55 = vld [vmem:[#allocation5 + $0x38] sm:$0xff]
    %v56 = vld [vmem:[#allocation5 + $0x40] sm:$0xff]
    %v57 = vld [vmem:[#allocation5 + $0x48] sm:$0xff]
    %v58 = vld [vmem:[#allocation5 + $0x50] sm:$0xff]
    %v59 = vld [vmem:[#allocation5 + $0x58] sm:$0xff]
    %v60 = vld [vmem:[#allocation5 + $0x60] sm:$0xff]
    %v61 = vld [vmem:[#allocation5 + $0x68] sm:$0xff]
    %v62 = vld [vmem:[#allocation5 + $0x70] sm:$0xff]
    %v63 = vld [vmem:[#allocation5 + $0x78] sm:$0xff]
    %v64 = vld [vmem:[#allocation5 + $0x80] sm:$0xff]
    %v65 = vld [vmem:[#allocation5 + $0x88] sm:$0xff]
    %v66 = vld [vmem:[#allocation5 + $0x90] sm:$0xff]
    %v67 = vld [vmem:[#allocation5 + $0x98] sm:$0xff]
    %v68 = vld [vmem:[#allocation5 + $0xa0] sm:$0xff]
    %v69 = vld [vmem:[#allocation5 + $0xa8] sm:$0xff]
    %v70 = vld [vmem:[#allocation5 + $0xb0] sm:$0xff]
    %v71 = vld [vmem:[#allocation5 + $0xb8] sm:$0xff]
    %v72 = vld [vmem:[#allocation5 + $0xc0] sm:$0xff]
    %v73 = vld [vmem:[#allocation5 + $0xc8] sm:$0xff]
    %v74 = vld [vmem:[#allocation5 + $0xd0] sm:$0xff]
    %v75 = vld [vmem:[#allocation5 + $0xd8] sm:$0xff]
    %v76 = vld [vmem:[#allocation5 + $0xe0] sm:$0xff]
    %v77 = vld [vmem:[#allocation5 + $0xe8] sm:$0xff]
    %v78 = vld [vmem:[#allocation5 + $0xf0] sm:$0xff]
    %v79 = vld [vmem:[#allocation5 + $0xf8] sm:$0xff]
    %v80 = vld [vmem:[#allocation5 + $0x100] sm:$0xff]
    %v81 = vld [vmem:[#allocation5 + $0x108] sm:$0xff]
    %v82 = vld [vmem:[#allocation5 + $0x110] sm:$0xff]
    %v83 = vld [vmem:[#allocation5 + $0x118] sm:$0xff]
    %v84 = vld [vmem:[#allocation5 + $0x120] sm:$0x33]
    %v85 = vld [vmem:[#allocation5 + $0x128] sm:$0x33]
    %v86 = vld [vmem:[#allocation5 + $0x130] sm:$0x33]
    %v87 = vld [vmem:[%s2] sm:$0x3f]
    %v89 = vlaneseq
    %v90 = vshrl.u32 %v89, 7
    %v91 = vsub.s32 0, %v90
    %v92 = vrot.slane %v87, %v91
    %v93 = vlaneseq
    %v94 = vshrl.u32 %v93, 7
    %v95 = vsub.s32 1, %v94
    %v96 = vrot.slane %v87, %v95
    %v97 = vlaneseq
    %v98 = vshrl.u32 %v97, 7
    %v99 = vsub.s32 2, %v98
    %v100 = vrot.slane %v87, %v99
    %v101 = vlaneseq
    %v102 = vshrl.u32 %v101, 7
    %v103 = vsub.s32 3, %v102
    %v104 = vrot.slane %v87, %v103
    %v105 = vlaneseq
    %v106 = vshrl.u32 %v105, 7
    %v107 = vsub.s32 4, %v106
    %v108 = vrot.slane %v87, %v107
    %v109 = vlaneseq
    %v110 = vshrl.u32 %v109, 7
    %v111 = vsub.s32 5, %v110
    %v112 = vrot.slane %v87, %v111
    %v158 = vunpack.c.l.b16 %v48
    %v159 = vunpack.c.h.b16 %v48
    %v160 = vunpack.c.l.b16 %v49
    %v161 = vunpack.c.h.b16 %v49
    %v162 = vunpack.c.l.b16 %v50
    %v163 = vunpack.c.h.b16 %v50
    %v164 = vunpack.c.l.b16 %v51
    %v165 = vunpack.c.h.b16 %v51
    %v166 = vunpack.c.l.b16 %v52
    %v167 = vunpack.c.h.b16 %v52
    %v168 = vunpack.c.l.b16 %v53
    %v169 = vunpack.c.h.b16 %v53
    %v170 = vunpack.c.l.b16 %v54
    %v171 = vunpack.c.h.b16 %v54
    %v172 = vunpack.c.l.b16 %v55
    %v173 = vunpack.c.h.b16 %v55
    %v174 = vunpack.c.l.b16 %v56
    %v175 = vunpack.c.h.b16 %v56
    %v176 = vunpack.c.l.b16 %v57
    %v177 = vunpack.c.h.b16 %v57
    %v178 = vunpack.c.l.b16 %v58
    %v179 = vunpack.c.h.b16 %v58
    %v180 = vunpack.c.l.b16 %v59
    %v181 = vunpack.c.h.b16 %v59
    %v182 = vunpack.c.l.b16 %v60
    %v183 = vunpack.c.h.b16 %v60
    %v184 = vunpack.c.l.b16 %v61
    %v185 = vunpack.c.h.b16 %v61
    %v186 = vunpack.c.l.b16 %v62
    %v187 = vunpack.c.h.b16 %v62
    %v188 = vunpack.c.l.b16 %v63
    %v189 = vunpack.c.h.b16 %v63
    %v190 = vunpack.c.l.b16 %v64
    %v191 = vunpack.c.h.b16 %v64
    %v192 = vunpack.c.l.b16 %v65
    %v193 = vunpack.c.h.b16 %v65
    %v194 = vunpack.c.l.b16 %v66
    %v195 = vunpack.c.h.b16 %v66
    %v196 = vunpack.c.l.b16 %v67
    %v197 = vunpack.c.h.b16 %v67
    %v198 = vunpack.c.l.b16 %v68
    %v199 = vunpack.c.h.b16 %v68
    %v200 = vunpack.c.l.b16 %v69
    %v201 = vunpack.c.h.b16 %v69
    %v202 = vunpack.c.l.b16 %v70
    %v203 = vunpack.c.h.b16 %v70
    %v204 = vunpack.c.l.b16 %v71
    %v205 = vunpack.c.h.b16 %v71
    %v206 = vunpack.c.l.b16 %v72
    %v207 = vunpack.c.h.b16 %v72
    %v208 = vunpack.c.l.b16 %v73
    %v209 = vunpack.c.h.b16 %v73
    %v210 = vunpack.c.l.b16 %v74
    %v211 = vunpack.c.h.b16 %v74
    %v212 = vunpack.c.l.b16 %v75
    %v213 = vunpack.c.h.b16 %v75
    %v214 = vunpack.c.l.b16 %v76
    %v215 = vunpack.c.h.b16 %v76
    %v216 = vunpack.c.l.b16 %v77
    %v217 = vunpack.c.h.b16 %v77
    %v218 = vunpack.c.l.b16 %v78
    %v219 = vunpack.c.h.b16 %v78
    %v220 = vunpack.c.l.b16 %v79
    %v221 = vunpack.c.h.b16 %v79
    %v222 = vunpack.c.l.b16 %v80
    %v223 = vunpack.c.h.b16 %v80
    %v224 = vunpack.c.l.b16 %v81
    %v225 = vunpack.c.h.b16 %v81
    %v226 = vunpack.c.l.b16 %v82
    %v227 = vunpack.c.h.b16 %v82
    %v228 = vunpack.c.l.b16 %v83
    %v229 = vunpack.c.h.b16 %v83
    %v230 = vunpack.c.l.b16 %v84
    %v231 = vunpack.c.h.b16 %v84
    %v232 = vunpack.c.l.b16 %v85
    %v233 = vunpack.c.h.b16 %v85
    %v234 = vunpack.c.l.b16 %v86
    %v235 = vunpack.c.h.b16 %v86
    %v236 = vpack.c.b16 %v164, %v158
    %v237 = vpack.c.b16 %v165, %v159
    %v238 = vpack.c.b16 %v166, %v160
    %v239 = vpack.c.b16 %v167, %v161
    %v240 = vpack.c.b16 %v168, %v162
    %v241 = vpack.c.b16 %v169, %v163
    %v242 = vpack.c.b16 %v176, %v170
    %v243 = vpack.c.b16 %v177, %v171
    %v244 = vpack.c.b16 %v178, %v172
    %v245 = vpack.c.b16 %v179, %v173
    %v246 = vpack.c.b16 %v180, %v174
    %v247 = vpack.c.b16 %v181, %v175
    %v248 = vpack.c.b16 %v188, %v182
    %v249 = vpack.c.b16 %v189, %v183
    %v250 = vpack.c.b16 %v190, %v184
    %v251 = vpack.c.b16 %v191, %v185
    %v252 = vpack.c.b16 %v192, %v186
    %v253 = vpack.c.b16 %v193, %v187
    %v254 = vpack.c.b16 %v200, %v194
    %v255 = vpack.c.b16 %v201, %v195
    %v256 = vpack.c.b16 %v202, %v196
    %v257 = vpack.c.b16 %v203, %v197
    %v258 = vpack.c.b16 %v204, %v198
    %v259 = vpack.c.b16 %v205, %v199
    %v260 = vpack.c.b16 %v212, %v206
    %v261 = vpack.c.b16 %v213, %v207
    %v262 = vpack.c.b16 %v214, %v208
    %v263 = vpack.c.b16 %v215, %v209
    %v264 = vpack.c.b16 %v216, %v210
    %v265 = vpack.c.b16 %v217, %v211
    %v266 = vpack.c.b16 %v224, %v218
    %v267 = vpack.c.b16 %v225, %v219
    %v268 = vpack.c.b16 %v226, %v220
    %v269 = vpack.c.b16 %v227, %v221
    %v270 = vpack.c.b16 %v228, %v222
    %v271 = vpack.c.b16 %v229, %v223
    %v272 = vpack.c.b16 %v230, %v230
    %v273 = vpack.c.b16 %v231, %v231
    %v274 = vpack.c.b16 %v232, %v232
    %v275 = vpack.c.b16 %v233, %v233
    %v276 = vpack.c.b16 %v234, %v234
    %v277 = vpack.c.b16 %v235, %v235
    %vm314 = vcmask 818176
    %v316 = vsel %vm314, %v47, 0
    %vm318 = vcmask 1041408
    %v320 = vsel %vm318, %v272, 0
    %v323 = vsel %vm318, %v273, 0
    %v326 = vsel %vm318, %v274, 0
    %v329 = vsel %vm318, %v275, 0
    %v332 = vsel %vm318, %v276, 0
    %v335 = vsel %vm318, %v277, 0
    %337 = vmatprep.subr.bf16.mxu0 %v237
    %338 = vmatpush1.bf16.msra.mxu0 %v236
    %339 = vmatprep.subr.bf16.mxu0 %v243
    %340 = vmatpush1.bf16.msra.mxu0 %v242
    %341 = vmatprep.subr.bf16.mxu0 %v249
    %342 = vmatpush1.bf16.msra.mxu0 %v248
    %343 = vmatprep.subr.bf16.mxu0 %v255
    %344 = vmatpush1.bf16.msra.mxu0 %v254
    %345 = vmatprep.subr.bf16.mxu0 %v261
    %346 = vmatpush1.bf16.msra.mxu0 %v260
    %347 = vmatprep.subr.bf16.mxu0 %v267
    %348 = vmatpush1.bf16.msra.mxu0 %v266
    %349 = vmatprep.subr.bf16.mxu0 %v323
    %350 = vmatpush1.bf16.msra.mxu0 %v320
    %351 = vmatprep.subr.bf16.mxu0 0
    %352 = vmatpush1.bf16.msra.mxu0 0
    %353 = vmatprep.subr.bf16.mxu0 0
    %354 = vmatpush1.bf16.msra.mxu0 0
    %355 = vmatprep.subr.bf16.mxu0 0
    %356 = vmatpush1.bf16.msra.mxu0 0
    %357 = vmatprep.subr.bf16.mxu0 0
    %358 = vmatpush1.bf16.msra.mxu0 0
    %359 = vmatprep.subr.bf16.mxu0 0
    %360 = vmatpush1.bf16.msra.mxu0 0
    %361 = vmatprep.subr.bf16.mxu0 0
    %362 = vmatpush1.bf16.msra.mxu0 0
    %363 = vmatprep.subr.bf16.mxu0 0
    %364 = vmatpush1.bf16.msra.mxu0 0
    %365 = vmatprep.subr.bf16.mxu0 0
    %366 = vmatpush1.bf16.msra.mxu0 0
    %367 = vmatprep.subr.bf16.mxu0 0
    %368 = vmatpush1.bf16.msra.mxu0 0
    %369 = vmatprep.mubr.bf16.mxu0 0
    %370 = vmatmul.mubr.bf16.gmra.mrb[0].mxu0 %v316
    %v371 = vpop.f32.mrb[0].mxu0
    %v372 = vadd.f32 %v92, %v371
    %v373 = vpop.f32.mrb[0].mxu0
    %v374 = vadd.f32 %v96, %v373
    %v375 = vpop.f32.mrb[0].mxu0
    %v376 = vpop.f32.mrb[0].mxu0
    %377 = vdwg.mxu0
    %378 = vmatprep.subr.bf16.mxu0 %v239
    %379 = vmatpush1.bf16.msra.mxu0 %v238
    %380 = vmatprep.subr.bf16.mxu0 %v245
    %381 = vmatpush1.bf16.msra.mxu0 %v244
    %382 = vmatprep.subr.bf16.mxu0 %v251
    %383 = vmatpush1.bf16.msra.mxu0 %v250
    %384 = vmatprep.subr.bf16.mxu0 %v257
    %385 = vmatpush1.bf16.msra.mxu0 %v256
    %386 = vmatprep.subr.bf16.mxu0 %v263
    %387 = vmatpush1.bf16.msra.mxu0 %v262
    %388 = vmatprep.subr.bf16.mxu0 %v269
    %389 = vmatpush1.bf16.msra.mxu0 %v268
    %390 = vmatprep.subr.bf16.mxu0 %v329
    %391 = vmatpush1.bf16.msra.mxu0 %v326
    %392 = vmatprep.subr.bf16.mxu0 0
    %393 = vmatpush1.bf16.msra.mxu0 0
    %394 = vmatprep.subr.bf16.mxu0 0
    %395 = vmatpush1.bf16.msra.mxu0 0
    %396 = vmatprep.subr.bf16.mxu0 0
    %397 = vmatpush1.bf16.msra.mxu0 0
    %398 = vmatprep.subr.bf16.mxu0 0
    %399 = vmatpush1.bf16.msra.mxu0 0
    %400 = vmatprep.subr.bf16.mxu0 0
    %401 = vmatpush1.bf16.msra.mxu0 0
    %402 = vmatprep.subr.bf16.mxu0 0
    %403 = vmatpush1.bf16.msra.mxu0 0
    %404 = vmatprep.subr.bf16.mxu0 0
    %405 = vmatpush1.bf16.msra.mxu0 0
    %406 = vmatprep.subr.bf16.mxu0 0
    %407 = vmatpush1.bf16.msra.mxu0 0
    %408 = vmatprep.subr.bf16.mxu0 0
    %409 = vmatpush1.bf16.msra.mxu0 0
    %410 = vmatprep.mubr.bf16.mxu0 0
    %411 = vmatmul.mubr.bf16.gmra.mrb[0].mxu0 %v316
    %v412 = vpop.f32.mrb[0].mxu0
    %v413 = vadd.f32 %v100, %v412
    %v414 = vpop.f32.mrb[0].mxu0
    %v415 = vadd.f32 %v104, %v414
    %v416 = vpop.f32.mrb[0].mxu0
    %v417 = vpop.f32.mrb[0].mxu0
    %418 = vdwg.mxu0
    %419 = vmatprep.subr.bf16.mxu0 %v241
    %420 = vmatpush1.bf16.msra.mxu0 %v240
    %421 = vmatprep.subr.bf16.mxu0 %v247
    %422 = vmatpush1.bf16.msra.mxu0 %v246
    %423 = vmatprep.subr.bf16.mxu0 %v253
    %424 = vmatpush1.bf16.msra.mxu0 %v252
    %425 = vmatprep.subr.bf16.mxu0 %v259
    %426 = vmatpush1.bf16.msra.mxu0 %v258
    %427 = vmatprep.subr.bf16.mxu0 %v265
    %428 = vmatpush1.bf16.msra.mxu0 %v264
    %429 = vmatprep.subr.bf16.mxu0 %v271
    %430 = vmatpush1.bf16.msra.mxu0 %v270
    %431 = vmatprep.subr.bf16.mxu0 %v335
    %432 = vmatpush1.bf16.msra.mxu0 %v332
    %433 = vmatprep.subr.bf16.mxu0 0
    %434 = vmatpush1.bf16.msra.mxu0 0
    %435 = vmatprep.subr.bf16.mxu0 0
    %436 = vmatpush1.bf16.msra.mxu0 0
    %437 = vmatprep.subr.bf16.mxu0 0
    %438 = vmatpush1.bf16.msra.mxu0 0
    %439 = vmatprep.subr.bf16.mxu0 0
    %440 = vmatpush1.bf16.msra.mxu0 0
    %441 = vmatprep.subr.bf16.mxu0 0
    %442 = vmatpush1.bf16.msra.mxu0 0
    %443 = vmatprep.subr.bf16.mxu0 0
    %444 = vmatpush1.bf16.msra.mxu0 0
    %445 = vmatprep.subr.bf16.mxu0 0
    %446 = vmatpush1.bf16.msra.mxu0 0
    %447 = vmatprep.subr.bf16.mxu0 0
    %448 = vmatpush1.bf16.msra.mxu0 0
    %449 = vmatprep.subr.bf16.mxu0 0
    %450 = vmatpush1.bf16.msra.mxu0 0
    %451 = vmatprep.mubr.bf16.mxu0 0
    %452 = vmatmul.mubr.bf16.gmra.mrb[0].mxu0 %v316
    %v453 = vpop.f32.mrb[0].mxu0
    %v454 = vadd.f32 %v108, %v453
    %v455 = vpop.f32.mrb[0].mxu0
    %v456 = vadd.f32 %v112, %v455
    %v457 = vpop.f32.mrb[0].mxu0
    %v458 = vpop.f32.mrb[0].mxu0
    %459 = vdwg.mxu0
    %460 = vst [vmem:[#allocation7] sm:$0x1f] %v372
    %461 = vst [vmem:[#allocation7 + $0x8] sm:$0x1f] %v374
    %462 = vst [vmem:[#allocation8] sm:$0x1f] %v413
    %463 = vst [vmem:[#allocation8 + $0x8] sm:$0x1f] %v415
    %464 = vst [vmem:[#allocation10] sm:$0x1f] %v454
    %465 = vst [vmem:[#allocation10 + $0x8] sm:$0x1f] %v456
    // Predicated region
    $region22: #{tpu_custom_call.1} parent=1 // pred_check
      _
    $region23: #{tpu_custom_call.1} parent=1 // pred_check_branch
      %467 = sbr.rel (0) target = $region25
    $region24: #{tpu_custom_call.1} parent=1 // pred_region
      %s469 = ssub.s32 256, 256
      %470 = vsyncadd [#allocation4], %s469
      %s472 = sshll.u32 [#allocation7], 4
      %s473 = int_to_ptr.vmem [resolvable:$true] %s472
      %475 = dma.vmem_to_hbm [thread:$0]  %s473, 256, %s3, [#allocation4]
    $region25: #{tpu_custom_call.1} parent=1 // pred_fallthru
      _
    // Predicated region
    $region26: #{tpu_custom_call.1} parent=1 // pred_check
      _
    $region27: #{tpu_custom_call.1} parent=1 // pred_check_branch
      %477 = sbr.rel (0) target = $region29
    $region28: #{tpu_custom_call.1} parent=1 // pred_region
      %s479 = ssub.s32 256, 256
      %480 = vsyncadd [#allocation9], %s479
      %s482 = sshll.u32 [#allocation8], 4
      %s483 = int_to_ptr.vmem [resolvable:$true] %s482
      %485 = dma.vmem_to_hbm [thread:$0]  %s483, 256, %s4, [#allocation9]
    $region29: #{tpu_custom_call.1} parent=1 // pred_fallthru
      _
    // Predicated region
    $region30: #{tpu_custom_call.1} parent=1 // pred_check
      _
    $region31: #{tpu_custom_call.1} parent=1 // pred_check_branch
      %487 = sbr.rel (0) target = $region33
    $region32: #{tpu_custom_call.1} parent=1 // pred_region
      %s489 = ssub.s32 256, 256
      %490 = vsyncadd [#allocation9], %s489
      %s492 = sshll.u32 [#allocation10], 4
      %s493 = int_to_ptr.vmem [resolvable:$true] %s492
      %495 = dma.vmem_to_hbm [thread:$0]  %s493, 256, %s5, [#allocation9]
    $region33: #{tpu_custom_call.1} parent=1 // pred_fallthru
      _
    // Predicated region
    $region34: #{tpu_custom_call.1} parent=1 // pred_check
      _
    $region35: #{tpu_custom_call.1} parent=1 // pred_check_branch
      %497 = sbr.rel (0) target = $region37
    $region36: #{tpu_custom_call.1} parent=1 // pred_region
      %498 = dma.done [#allocation4], 256
    $region37: #{tpu_custom_call.1} parent=1 // pred_fallthru
      _
    // Predicated region
    $region38: #{tpu_custom_call.1} parent=1 // pred_check
      _
    $region39: #{tpu_custom_call.1} parent=1 // pred_check_branch
      %500 = sbr.rel (0) target = $region41
    $region40: #{tpu_custom_call.1} parent=1 // pred_region
      %501 = dma.done [#allocation9], 256
    $region41: #{tpu_custom_call.1} parent=1 // pred_fallthru
      _
    // Predicated region
    $region42: #{tpu_custom_call.1} parent=1 // pred_check
      _
    $region43: #{tpu_custom_call.1} parent=1 // pred_check_branch
      %503 = sbr.rel (0) target = $region45
    $region44: #{tpu_custom_call.1} parent=1 // pred_region
      %504 = dma.done [#allocation9], 256
    $region45: #{tpu_custom_call.1} parent=1 // pred_fallthru
      _
    %505 = vsyncpa [#allocation3], 1
    %506 = vsyncpa [#allocation6], 1
    %507 = vsyncpa [#allocation4], 1
    %508 = vsyncpa [#allocation9], 1

</llo_original>
